<compile_context>
chip_gen: v6e
topology: v6e:2x2x1
jax: 0.10.0
libtpu: 0.0.40
codegen_flags: <defaults>
</compile_context>

<pallas_src>
import functools
import math

import jax
import jax.numpy as jnp
from jax.experimental import pallas as pl
from jax.experimental.pallas import tpu as pltpu

_LANE = 128
_SUBLANE = 8
_TARGET_TILE_BYTES = 1 << 20  # ~1 MiB per input per grid step
_CHUNK_ROWS = 64              # in-kernel streaming chunk (multiple of 8)


def _round_up(x, m):
    return ((x + m - 1) // m) * m


def _cdiv(a, b):
    return -(-a // b)


def _accumulate_block(a_ref, b_ref, out_ref, *, block_rows, chunk_rows,
                      valid_rows):
    """Stream one (block_rows, 128) tile in chunk_rows-row chunks, folding
    sum(a*a), sum(b*b), sum(a*b) down to (8, 128) vector partials and adding
    them into the resident out_ref accumulator.

    valid_rows: None for a fully-valid interior block, or a static int giving
    the number of real rows in a partial edge / phantom block (rows beyond it
    hold whatever Pallas padded the block with and must be zeroed).
    """
    trips = block_rows // chunk_rows

    def body(c, carry):
        aa, bb, ab = carry
        r0 = pl.multiple_of(c * chunk_rows, chunk_rows)
        a = a_ref[pl.ds(r0, chunk_rows), :].astype(jnp.float32)
        b = b_ref[pl.ds(r0, chunk_rows), :].astype(jnp.float32)
        if valid_rows is not None:
            rid = jax.lax.broadcasted_iota(jnp.int32, a.shape, 0) + r0
            keep = rid < valid_rows
            a = jnp.where(keep, a, 0.0)
            b = jnp.where(keep, b, 0.0)
        # VPU-only fold of the chunk down to one (8, 128) tile per statistic.
        aa = aa + (a * a).reshape(-1, _SUBLANE, _LANE).sum(axis=0)
        bb = bb + (b * b).reshape(-1, _SUBLANE, _LANE).sum(axis=0)
        ab = ab + (a * b).reshape(-1, _SUBLANE, _LANE).sum(axis=0)
        return aa, bb, ab

    zero = jnp.zeros((_SUBLANE, _LANE), jnp.float32)
    aa, bb, ab = jax.lax.fori_loop(0, trips, body, (zero, zero, zero),
                                   unroll=True)
    out_ref[0] += aa
    out_ref[1] += bb
    out_ref[2] += ab


def _partials_kernel(a_ref, b_ref, out_ref, *, rows, block_rows, chunk_rows,
                     blocks_per_slot, num_blocks, num_slots):
    p = pl.program_id(0)   # TensorCore slot (size 1 on single-TC chips)
    i = pl.program_id(1)   # streaming / reduction axis

    @pl.when(i == 0)
    def _():
        out_ref[...] = jnp.zeros_like(out_ref)

    # Static structure of the grid: which (p, i) needs masking / skipping.
    has_edge = (rows % block_rows) != 0                      # partial last block
    has_phantom = num_slots * blocks_per_slot > num_blocks   # clamped duplicate
    edge_valid_rows = rows - (num_blocks - 1) * block_rows   # static int

    accum = functools.partial(_accumulate_block, a_ref, b_ref, out_ref,
                              block_rows=block_rows, chunk_rows=chunk_rows)

    live = None
    if has_phantom:
        # Phantom blocks re-read an in-bounds block (clamped index_map) but
        # must contribute nothing.
        live = (p * blocks_per_slot + i) < num_blocks

    if has_edge:
        pe = (num_blocks - 1) // blocks_per_slot
        ie = (num_blocks - 1) % blocks_per_slot
        is_edge = jnp.logical_and(p == pe, i == ie)
        interior = jnp.logical_not(is_edge)
        if live is not None:
            interior = jnp.logical_and(interior, live)

        @pl.when(interior)
        def _():
            accum(valid_rows=None)          # mask-free fast path

        @pl.when(is_edge)
        def _():
            accum(valid_rows=edge_valid_rows)
    else:
        if live is not None:
            @pl.when(live)
            def _():
                accum(valid_rows=None)
        else:
            accum(valid_rows=None)          # mask-free fast path (common case)


def _is_multi_core_chip():
    """True only for chips with >1 TensorCore per chip (v7x)."""
    try:
        kind = jax.devices()[0].device_kind.lower()
    except Exception:  # pragma: no cover - defensive
        return False
    return "v7" in kind


def _run_partials(a_rows, b_rows, rows, itemsize):
    """pallas_call producing [sum a^2, sum b^2, sum a*b] as vector partials."""
    # ~1 MiB per input per grid step, dtype-scaled, sublane-aligned.
    max_rows = max(_SUBLANE,
                   (_TARGET_TILE_BYTES // (_LANE * itemsize)) // _SUBLANE * _SUBLANE)
    block_rows = min(max_rows, _round_up(rows, _SUBLANE))
    chunk_rows = math.gcd(block_rows, _CHUNK_ROWS)
    num_blocks = _cdiv(rows, block_rows)

    # Leading slot axis only where it can actually shard across TensorCores.
    num_slots = 2 if (_is_multi_core_chip() and num_blocks >= 2) else 1
    blocks_per_slot = _cdiv(num_blocks, num_slots)
    needs_clamp = num_slots * blocks_per_slot != num_blocks

    def in_map(p, i):
        blk = p * blocks_per_slot + i
        if needs_clamp:
            blk = jnp.minimum(blk, num_blocks - 1)
        return (blk, 0)

    tile_spec = pl.BlockSpec((block_rows, _LANE), in_map)
    out_spec = pl.BlockSpec((None, 3, _SUBLANE, _LANE),
                            lambda p, i: (p, 0, 0, 0))

    if num_slots == 2:
        dim_sem = (pltpu.CORE_PARALLEL, pltpu.ARBITRARY)
    else:
        dim_sem = ("arbitrary", "arbitrary")

    n_main = rows * _LANE
    cost = pl.CostEstimate(
        flops=6 * n_main,                                   # 3 mul + 3 add / elem
        transcendentals=0,
        bytes_accessed=2 * n_main * itemsize + num_slots * 3 * _SUBLANE * _LANE * 4,
    )

    kernel = functools.partial(
        _partials_kernel,
        rows=rows,
        block_rows=block_rows,
        chunk_rows=chunk_rows,
        blocks_per_slot=blocks_per_slot,
        num_blocks=num_blocks,
        num_slots=num_slots,
    )

    partials = pl.pallas_call(
        kernel,
        out_shape=jax.ShapeDtypeStruct((num_slots, 3, _SUBLANE, _LANE),
                                       jnp.float32),
        grid=(num_slots, blocks_per_slot),
        in_specs=[tile_spec, tile_spec],
        out_specs=out_spec,
        compiler_params=pltpu.CompilerParams(dimension_semantics=dim_sem),
        cost_estimate=cost,
    )(a_rows, b_rows)

    # Tiny epilogue: cross-lane reduce of the (slots, 3, 8, 128) partials.
    sums = jnp.sum(partials, axis=(0, 2, 3))
    return sums[0], sums[1], sums[2]


def l2norm_loss(first, second):
    """Pallas equivalent of L2Norm.forward(first, second). Returns f32 scalar."""
    assert first.shape == second.shape, "MSE requires matching shapes"
    n_elem = int(math.prod(first.shape))
    itemsize = jnp.dtype(first.dtype).itemsize

    a_flat = first.reshape(-1)
    b_flat = second.reshape(-1)
    main = (n_elem // _LANE) * _LANE   # largest lane-aligned prefix

    ssa = jnp.float32(0.0)
    ssb = jnp.float32(0.0)
    sab = jnp.float32(0.0)

    if main:
        if main == n_elem:
            a_rows = a_flat.reshape(-1, _LANE)     # free reshape, no copy
            b_rows = b_flat.reshape(-1, _LANE)
        else:
            # TODO(synk): for ragged sizes this slice may materialize a copy of
            # the lane-aligned prefix; a pl.ANY manual-DMA tail would avoid it.
            a_rows = a_flat[:main].reshape(-1, _LANE)
            b_rows = b_flat[:main].reshape(-1, _LANE)
        ssa, ssb, sab = _run_partials(a_rows, b_rows, main // _LANE, itemsize)

    if main != n_elem:
        # <128-element tail handled in plain JAX.
        ta = a_flat[main:].astype(jnp.float32)
        tb = b_flat[main:].astype(jnp.float32)
        ssa = ssa + jnp.sum(ta * ta)
        ssb = ssb + jnp.sum(tb * tb)
        sab = sab + jnp.sum(ta * tb)

    cos = sab / (jnp.sqrt(ssa) * jnp.sqrt(ssb))
    # mean((a/||a|| - b/||b||)^2) == (2 - 2*cos(a, b)) / N
    return (2.0 - 2.0 * cos) / jnp.float32(n_elem)


def _reference(first, second):
    a = first.astype(jnp.float32)
    b = second.astype(jnp.float32)
    an = a / jnp.sqrt(jnp.sum(a * a))
    bn = b / jnp.sqrt(jnp.sum(b * b))
    return jnp.mean((an - bn) ** 2)


if __name__ == "__main__":
    key = jax.random.PRNGKey(0)
    k1, k2, k3, k4 = jax.random.split(key, 4)

    # Shapes consistent with a typical conv-feature loss target (NCHW).
    first = jax.random.normal(k1, (2, 4, 16, 16), dtype=jnp.float32)
    second = jax.random.normal(k2, (2, 4, 16, 16), dtype=jnp.float32)
    out = jax.block_until_ready(l2norm_loss(first, second))
    ref = _reference(first, second)
    assert jnp.allclose(out, ref, rtol=1e-4, atol=1e-6), (out, ref)

    # Ragged size: exercises the partial edge block + scalar tail path.
    fr = jax.random.normal(k3, (5, 7, 11), dtype=jnp.float32)
    sr = jax.random.normal(k4, (5, 7, 11), dtype=jnp.float32)
    out_r = jax.block_until_ready(l2norm_loss(fr, sr))
    ref_r = _reference(fr, sr)
    assert jnp.allclose(out_r, ref_r, rtol=1e-4, atol=1e-6), (out_r, ref_r)

    print("KERNEL_OK")
</pallas_src>

<mosaic_0001>
module attributes {stable_mosaic.version = 11 : i64} {
  func.func @_partials_kernel(%arg0: i32, %arg1: i32, %arg2: memref<16x128xf32, #tpu.memory_space<vmem>>, %arg3: memref<16x128xf32, #tpu.memory_space<vmem>>, %arg4: memref<1x3x8x128xf32, #tpu.memory_space<vmem>>) attributes {dimension_semantics = [#tpu.dimension_semantics<arbitrary>, #tpu.dimension_semantics<arbitrary>], iteration_bounds = array<i64: 1, 1>, scalar_prefetch = 0 : i64, scratch_operands = 0 : i64, tpu.core_type = #tpu.core_type<tc>, window_params = [{transform_indices = @transform_0, window_bounds = array<i64: 16, 128>}, {transform_indices = @transform_1, window_bounds = array<i64: 16, 128>}, {transform_indices = @transform_2, window_bounds = array<i64: 1, 3, 8, 128>}]} {
    %c0_i32 = arith.constant 0 : i32
    %0 = arith.cmpi eq, %arg1, %c0_i32 : i32
    %1 = arith.extui %0 : i1 to i32
    %c0_i32_0 = arith.constant 0 : i32
    %2 = arith.cmpi ne, %1, %c0_i32_0 : i32
    scf.if %2 {
      %cst_28 = arith.constant 0.000000e+00 : f32
      %40 = vector.broadcast %cst_28 : f32 to vector<3x8x128xf32>
      %c0_29 = arith.constant 0 : index
      %c0_30 = arith.constant 0 : index
      %c0_31 = arith.constant 0 : index
      %c0_32 = arith.constant 0 : index
      %41 = vector.load %arg4[%c0_29, %c0_30, %c0_31, %c0_32] : memref<1x3x8x128xf32, #tpu.memory_space<vmem>>, vector<1x3x8x128xf32>
      %42 = vector.shape_cast %41 : vector<1x3x8x128xf32> to vector<3x8x128xf32>
      %43 = vector.shape_cast %40 : vector<3x8x128xf32> to vector<1x3x8x128xf32>
      tpu.vector_store %arg4[%c0_29, %c0_30, %c0_31, %c0_32], %43 {strides = array<i32>} : memref<1x3x8x128xf32, #tpu.memory_space<vmem>>, vector<1x3x8x128xf32>,
    } else {
    }
    %cst = arith.constant 0.000000e+00 : f32
    %3 = vector.broadcast %cst : f32 to vector<8x128xf32>
    %c0_i32_1 = arith.constant 0 : i32
    %c16_i32 = arith.constant 16 : i32
    %4 = arith.muli %c0_i32_1, %c16_i32 : i32
    %5 = tpu.assume_multiple %4, 16 : i32
    %6 = arith.index_cast %5 : i32 to index
    %c0 = arith.constant 0 : index
    %7 = vector.load %arg2[%6, %c0] : memref<16x128xf32, #tpu.memory_space<vmem>>, vector<16x128xf32>
    %8 = arith.index_cast %5 : i32 to index
    %c0_2 = arith.constant 0 : index
    %9 = vector.load %arg3[%8, %c0_2] : memref<16x128xf32, #tpu.memory_space<vmem>>, vector<16x128xf32>
    %10 = arith.mulf %7, %7 : vector<16x128xf32>
    %11 = vector.shape_cast %10 : vector<16x128xf32> to vector<2x8x128xf32>
    %cst_3 = arith.constant dense<0.000000e+00> : vector<8x128xf32>
    %12 = vector.multi_reduction <add>, %11, %cst_3 [0] : vector<2x8x128xf32> to vector<8x128xf32>
    %13 = arith.addf %3, %12 : vector<8x128xf32>
    %14 = arith.mulf %9, %9 : vector<16x128xf32>
    %15 = vector.shape_cast %14 : vector<16x128xf32> to vector<2x8x128xf32>
    %cst_4 = arith.constant dense<0.000000e+00> : vector<8x128xf32>
    %16 = vector.multi_reduction <add>, %15, %cst_4 [0] : vector<2x8x128xf32> to vector<8x128xf32>
    %17 = arith.addf %3, %16 : vector<8x128xf32>
    %18 = arith.mulf %7, %9 : vector<16x128xf32>
    %19 = vector.shape_cast %18 : vector<16x128xf32> to vector<2x8x128xf32>
    %cst_5 = arith.constant dense<0.000000e+00> : vector<8x128xf32>
    %20 = vector.multi_reduction <add>, %19, %cst_5 [0] : vector<2x8x128xf32> to vector<8x128xf32>
    %21 = arith.addf %3, %20 : vector<8x128xf32>
    %c1_i32 = arith.constant 1 : i32
    %c0_6 = arith.constant 0 : index
    %c0_7 = arith.constant 0 : index
    %c0_8 = arith.constant 0 : index
    %c0_9 = arith.constant 0 : index
    %22 = vector.load %arg4[%c0_6, %c0_7, %c0_8, %c0_9] : memref<1x3x8x128xf32, #tpu.memory_space<vmem>>, vector<1x1x8x128xf32>
    %23 = vector.shape_cast %22 : vector<1x1x8x128xf32> to vector<8x128xf32>
    %24 = arith.addf %23, %13 : vector<8x128xf32>
    %c0_10 = arith.constant 0 : index
    %c0_11 = arith.constant 0 : index
    %c0_12 = arith.constant 0 : index
    %c0_13 = arith.constant 0 : index
    %25 = vector.load %arg4[%c0_10, %c0_11, %c0_12, %c0_13] : memref<1x3x8x128xf32, #tpu.memory_space<vmem>>, vector<1x1x8x128xf32>
    %26 = vector.shape_cast %25 : vector<1x1x8x128xf32> to vector<8x128xf32>
    %27 = vector.shape_cast %24 : vector<8x128xf32> to vector<1x1x8x128xf32>
    tpu.vector_store %arg4[%c0_10, %c0_11, %c0_12, %c0_13], %27 {strides = array<i32>} : memref<1x3x8x128xf32, #tpu.memory_space<vmem>>, vector<1x1x8x128xf32>,
    %c0_14 = arith.constant 0 : index
    %c1 = arith.constant 1 : index
    %c0_15 = arith.constant 0 : index
    %c0_16 = arith.constant 0 : index
    %28 = vector.load %arg4[%c0_14, %c1, %c0_15, %c0_16] : memref<1x3x8x128xf32, #tpu.memory_space<vmem>>, vector<1x1x8x128xf32>
    %29 = vector.shape_cast %28 : vector<1x1x8x128xf32> to vector<8x128xf32>
    %30 = arith.addf %29, %17 : vector<8x128xf32>
    %c0_17 = arith.constant 0 : index
    %c1_18 = arith.constant 1 : index
    %c0_19 = arith.constant 0 : index
    %c0_20 = arith.constant 0 : index
    %31 = vector.load %arg4[%c0_17, %c1_18, %c0_19, %c0_20] : memref<1x3x8x128xf32, #tpu.memory_space<vmem>>, vector<1x1x8x128xf32>
    %32 = vector.shape_cast %31 : vector<1x1x8x128xf32> to vector<8x128xf32>
    %33 = vector.shape_cast %30 : vector<8x128xf32> to vector<1x1x8x128xf32>
    tpu.vector_store %arg4[%c0_17, %c1_18, %c0_19, %c0_20], %33 {strides = array<i32>} : memref<1x3x8x128xf32, #tpu.memory_space<vmem>>, vector<1x1x8x128xf32>,
    %c0_21 = arith.constant 0 : index
    %c2 = arith.constant 2 : index
    %c0_22 = arith.constant 0 : index
    %c0_23 = arith.constant 0 : index
    %34 = vector.load %arg4[%c0_21, %c2, %c0_22, %c0_23] : memref<1x3x8x128xf32, #tpu.memory_space<vmem>>, vector<1x1x8x128xf32>
    %35 = vector.shape_cast %34 : vector<1x1x8x128xf32> to vector<8x128xf32>
    %36 = arith.addf %35, %21 : vector<8x128xf32>
    %c0_24 = arith.constant 0 : index
    %c2_25 = arith.constant 2 : index
    %c0_26 = arith.constant 0 : index
    %c0_27 = arith.constant 0 : index
    %37 = vector.load %arg4[%c0_24, %c2_25, %c0_26, %c0_27] : memref<1x3x8x128xf32, #tpu.memory_space<vmem>>, vector<1x1x8x128xf32>
    %38 = vector.shape_cast %37 : vector<1x1x8x128xf32> to vector<8x128xf32>
    %39 = vector.shape_cast %36 : vector<8x128xf32> to vector<1x1x8x128xf32>
    tpu.vector_store %arg4[%c0_24, %c2_25, %c0_26, %c0_27], %39 {strides = array<i32>} : memref<1x3x8x128xf32, #tpu.memory_space<vmem>>, vector<1x1x8x128xf32>,
    return
  }
  func.func @transform_0(%arg0: i32, %arg1: i32) -> (i32, i32) {
    %c1_i32 = arith.constant 1 : i32
    %0 = arith.muli %arg0, %c1_i32 : i32
    %1 = arith.addi %0, %arg1 : i32
    %c0_i32 = arith.constant 0 : i32
    %c0_i32_0 = arith.constant 0 : i32
    return %1, %c0_i32 : i32, i32
  }
  func.func @transform_1(%arg0: i32, %arg1: i32) -> (i32, i32) {
    %c1_i32 = arith.constant 1 : i32
    %0 = arith.muli %arg0, %c1_i32 : i32
    %1 = arith.addi %0, %arg1 : i32
    %c0_i32 = arith.constant 0 : i32
    %c0_i32_0 = arith.constant 0 : i32
    return %1, %c0_i32 : i32, i32
  }
  func.func @transform_2(%arg0: i32, %arg1: i32) -> (i32, i32, i32, i32) {
    %c0_i32 = arith.constant 0 : i32
    %c0_i32_0 = arith.constant 0 : i32
    %c0_i32_1 = arith.constant 0 : i32
    %c0_i32_2 = arith.constant 0 : i32
    return %arg0, %c0_i32, %c0_i32_0, %c0_i32_1 : i32, i32, i32, i32
  }
}

</mosaic_0001>

<llo_original>
// kernel: tpu_custom_call.1
$region0: #{tpu_custom_call.1}
  #allocation0 [shape = 'u32[]', space=smem, size = 0x4, offset = 0x4, fixed_abs, tag = 'smem constant byte address 0x4 - core index']
  #allocation1 [shape = 'u32[144,128]{1,0:T(1,128)}', space=vmem, size = 0x12000, scoped, tag = 'internal scratch']
  %s0 = inlined_call_operand.hbm [shape: f32[16,128], index: 0, kind: input, shape index: {}]
  %s1 = inlined_call_operand.hbm [shape: f32[16,128], index: 1, kind: input, shape index: {}]
  %s2 = inlined_call_operand.hbm [shape: f32[1,3,8,128], index: 2, kind: output, shape index: {}]
  %s3 = sld [smem:[#allocation0]]
  $region30: #{tpu_custom_call.1} parent=0
    _
  %s5 = ssub.s32 1, %s3
  %s6 = scalar_select 0, %s5, %s3
  $region1: #{tpu_custom_call.1} parent=0
    #allocation2 [shape = 'u8[8192]{0}', space=vmem, size = 0x2000, scoped, tag = 'input window, operand 0, single buffered']
    #allocation3 [shape = 's32[1]{0}', space=sflag, size = 0x4, scoped, tag = 'scoped memory for tpu_custom_call.1']
    #allocation4 [shape = 's32[1]{0}', space=sflag, size = 0x4, scoped, tag = 'scoped memory for tpu_custom_call.1']
    #allocation5 [shape = 'u8[8192]{0}', space=vmem, size = 0x2000, scoped, tag = 'input window, operand 1, single buffered']
    #allocation6 [shape = 's32[1]{0}', space=sflag, size = 0x4, scoped, tag = 'scoped memory for tpu_custom_call.1']
    #allocation7 [shape = 'u8[12288]{0}', space=vmem, size = 0x3000, scoped, tag = 'output window, operand 0, single buffered']
    %7 = vsyncpa [#allocation3], 0
    %8 = vsyncpa [#allocation6], 0
    %9 = vsyncpa [#allocation4], 0
    // Predicated region
    $region2: #{tpu_custom_call.1} parent=1 // pred_check
      _
    $region3: #{tpu_custom_call.1} parent=1 // pred_check_branch
      %11 = sbr.rel (0) target = $region5
    $region4: #{tpu_custom_call.1} parent=1 // pred_region
      %s12 = sadd.s32 0, 0
      %s13 = smul.u32 2, %s12
      %s15 = ssub.s32 256, 256
      %16 = vsyncadd [#allocation3], %s15
      %s17 = smul.addr %s13, 128
      %s18 = scalar_lea.hbm %s0, %s17
      %s19 = sshll.u32 [#allocation2], 4
      %s20 = int_to_ptr.vmem [resolvable:$true] %s19
      %25 = dma.hbm_to_vmem [thread:$0]  %s18, 256, %s20, [#allocation3], 128, 128, 8
    $region5: #{tpu_custom_call.1} parent=1 // pred_fallthru
      _
    // Predicated region
    $region6: #{tpu_custom_call.1} parent=1 // pred_check
      _
    $region7: #{tpu_custom_call.1} parent=1 // pred_check_branch
      %27 = sbr.rel (0) target = $region9
    $region8: #{tpu_custom_call.1} parent=1 // pred_region
      %s28 = sadd.s32 0, 0
      %s29 = smul.u32 2, %s28
      %s31 = ssub.s32 256, 256
      %32 = vsyncadd [#allocation6], %s31
      %s33 = smul.addr %s29, 128
      %s34 = scalar_lea.hbm %s1, %s33
      %s35 = sshll.u32 [#allocation5], 4
      %s36 = int_to_ptr.vmem [resolvable:$true] %s35
      %41 = dma.hbm_to_vmem [thread:$0]  %s34, 256, %s36, [#allocation6], 128, 128, 8
    $region9: #{tpu_custom_call.1} parent=1 // pred_fallthru
      _
    // Predicated region
    $region10: #{tpu_custom_call.1} parent=1 // pred_check
      _
    $region11: #{tpu_custom_call.1} parent=1 // pred_check_branch
      %43 = sbr.rel (0) target = $region13
    $region12: #{tpu_custom_call.1} parent=1 // pred_region
      %44 = dma.done [#allocation3], 256
    $region13: #{tpu_custom_call.1} parent=1 // pred_fallthru
      _
    // Predicated region
    $region14: #{tpu_custom_call.1} parent=1 // pred_check
      _
    $region15: #{tpu_custom_call.1} parent=1 // pred_check_branch
      %46 = sbr.rel (0) target = $region17
    $region16: #{tpu_custom_call.1} parent=1 // pred_region
      %47 = dma.done [#allocation6], 256
    $region17: #{tpu_custom_call.1} parent=1 // pred_fallthru
      _
    %s48 = sadd.s32 0, 0
    %s49 = smul.u32 2, %s48
    %s50 = sadd.s32 0, 0
    %s51 = smul.u32 2, %s50
    %p52 = scmp.eq.s32.totalorder 0, 0
    // Predicated region
    $region18: #{tpu_custom_call.1} parent=1 // pred_check
      %p53 = pneg %p52
    $region19: #{tpu_custom_call.1} parent=1 // pred_check_branch
      %55 = sbr.rel (%p53) target = $region21
    $region20: #{tpu_custom_call.1} parent=1 // pred_region
      %56 = vst [vmem:[#allocation7] sm:$0xff] 0.0
      %57 = vst [vmem:[#allocation7 + $0x8] sm:$0xff] 0.0
      %58 = vst [vmem:[#allocation7 + $0x10] sm:$0xff] 0.0
    $region21: #{tpu_custom_call.1} parent=1 // pred_fallthru
      _
    %v59 = vld [vmem:[#allocation2] sm:$0xff]
    %v60 = vld [vmem:[#allocation2 + $0x8] sm:$0xff]
    %v61 = vld [vmem:[#allocation5] sm:$0xff]
    %v62 = vld [vmem:[#allocation5 + $0x8] sm:$0xff]
    %v63 = vmul.f32 %v59, %v59
    %v64 = vmul.f32 %v60, %v60
    %v65 = vadd.f32 %v63, %v64
    %v66 = vadd.f32 %v65, 0.0
    %v67 = vmul.f32 %v61, %v61
    %v68 = vmul.f32 %v62, %v62
    %v69 = vadd.f32 %v67, %v68
    %v70 = vadd.f32 %v69, 0.0
    %v71 = vmul.f32 %v59, %v61
    %v72 = vmul.f32 %v60, %v62
    %v73 = vadd.f32 %v71, %v72
    %v74 = vadd.f32 %v73, 0.0
    %v75 = vld [vmem:[#allocation7] sm:$0xff]
    %v76 = vadd.f32 %v75, %v66
    %77 = vst [vmem:[#allocation7] sm:$0xff] %v76
    %s78 = scalar_lea.vmem [#allocation7], 8
    %v79 = vld [vmem:[%s78] sm:$0xff]
    %v80 = vadd.f32 %v79, %v70
    %81 = vst [vmem:[%s78] sm:$0xff] %v80
    %s82 = scalar_lea.vmem [#allocation7], 16
    %v83 = vld [vmem:[%s82] sm:$0xff]
    %v84 = vadd.f32 %v83, %v74
    %85 = vst [vmem:[%s82] sm:$0xff] %v84
    // Predicated region
    $region22: #{tpu_custom_call.1} parent=1 // pred_check
      _
    $region23: #{tpu_custom_call.1} parent=1 // pred_check_branch
      %87 = sbr.rel (0) target = $region25
    $region24: #{tpu_custom_call.1} parent=1 // pred_region
      %s89 = ssub.s32 384, 384
      %90 = vsyncadd [#allocation4], %s89
      %s91 = sshll.u32 [#allocation7], 4
      %s92 = int_to_ptr.vmem [resolvable:$true] %s91
      %97 = dma.vmem_to_hbm [thread:$0]  %s92, 384, %s2, [#allocation4], 128, 128, 8
    $region25: #{tpu_custom_call.1} parent=1 // pred_fallthru
      _
    // Predicated region
    $region26: #{tpu_custom_call.1} parent=1 // pred_check
      _
    $region27: #{tpu_custom_call.1} parent=1 // pred_check_branch
      %99 = sbr.rel (0) target = $region29
    $region28: #{tpu_custom_call.1} parent=1 // pred_region
      %100 = dma.done [#allocation4], 384
    $region29: #{tpu_custom_call.1} parent=1 // pred_fallthru
      _
    %101 = vsyncpa [#allocation3], 1
    %102 = vsyncpa [#allocation6], 1
    %103 = vsyncpa [#allocation4], 1

</llo_original>
